<compile_context>
chip_gen: v5e
topology: v5e:2x2
jax: 0.10.0
libtpu: 0.0.40
codegen_flags: <defaults>
</compile_context>

<pallas_src>
import functools

import numpy as np
import jax
import jax.numpy as jnp
from jax.experimental import pallas as pl
from jax.experimental.pallas import tpu as pltpu

IN_DIM = 3
HIDDEN = 32
OUT_DIM = 32

PACK = 4                     # points packed per 128-lane row
LANES = PACK * OUT_DIM       # 128
IN_LANES = PACK * IN_DIM     # 12
ROW_ALIGN = 8 * PACK         # packed sublane (8) constraint -> rows multiple of 32
_MIN_SPLIT_ROWS = 2048       # above 2*this, force >=2 grid blocks (v7x megacore)


def _cdiv(a, b):
    return -(-a // b)


def _round_up(a, b):
    return _cdiv(a, b) * b


def _mlp_kernel(xp_ref, w1p_ref, b1p_ref, w2p_ref, b2p_ref, op_ref):
    # xp_ref : (rows_b, 12)   -- 4 points per row, features interleaved
    # w1p_ref: (12, 128)      -- kron(I4, w1), block diagonal
    # b1p_ref: (1, 128)       -- tile(b1, 4)
    # w2p_ref: (128, 128)     -- kron(I4, w2), block diagonal
    # b2p_ref: (1, 128)       -- tile(b2, 4)
    # op_ref : (rows_b, 128)  -- 4 points per row (lane-dense output)
    xp = xp_ref[...]
    h = jnp.dot(xp, w1p_ref[...], preferred_element_type=jnp.float32)
    h = jnp.maximum(h + b1p_ref[...], 0.0)                 # packed hidden (rows_b, 128)
    y = jnp.dot(h, w2p_ref[...], preferred_element_type=jnp.float32)
    op_ref[...] = jnp.maximum(y + b2p_ref[...], 0.0).astype(op_ref.dtype)


@functools.partial(jax.jit, static_argnames=("tm", "out_dtype"))
def position_encoder_simple(x, w1, b1, w2, b2, *, tm=16384, out_dtype=jnp.float32):
    """x: (N, k, 3) float32 -> (N, k, OUT_DIM) out_dtype (default float32)."""
    N, k, in_dim = x.shape
    assert in_dim == IN_DIM
    if tm % ROW_ALIGN != 0:
        raise ValueError(f"tm must be a multiple of {ROW_ALIGN}")

    M = N * k
    Ma = _round_up(M, ROW_ALIGN)

    # Effective row tile: as large as possible (amortize per-step overhead),
    # but capped so large problems split into >=2 blocks for v7x's 2 TCs.
    tm_eff = min(tm, Ma)
    if Ma >= 2 * _MIN_SPLIT_ROWS:
        tm_eff = min(tm_eff, _round_up(_cdiv(Ma, 2), ROW_ALIGN))
    M_pad = _round_up(M, tm_eff)

    x2 = x.reshape(M, IN_DIM)
    if M_pad != M:
        x2 = jnp.pad(x2, ((0, M_pad - M), (0, 0)))
    # Free row-major reinterpretation: 4 points per packed row.
    xp = x2.reshape(M_pad // PACK, IN_LANES)

    # Block-diagonal packed weights / tiled biases (tiny; fused under jit).
    eye = jnp.eye(PACK, dtype=w1.dtype)
    w1p = jnp.kron(eye, w1)                       # (12, 128)
    w2p = jnp.kron(eye, w2)                       # (128, 128)
    b1p = jnp.tile(b1, PACK).reshape(1, LANES)    # (1, 128)
    b2p = jnp.tile(b2, PACK).reshape(1, LANES)    # (1, 128)

    rows_b = tm_eff // PACK
    grid = (M_pad // tm_eff,)
    out_bytes = np.dtype(out_dtype).itemsize

    # VMEM budget: 2x input buffers (12 lanes pad to 128), 2x output buffers,
    # two f32 packed intermediates, plus slack.  Clamp to <=48 MiB (v7x headroom).
    vmem_est = rows_b * 128 * (2 * 4 + 2 * out_bytes + 2 * 4) + (1 << 20)
    vmem_limit = int(min(48 << 20, max(32 << 20, 2 * vmem_est)))

    cost = pl.CostEstimate(
        flops=2 * M_pad * (IN_DIM * HIDDEN + HIDDEN * OUT_DIM),
        transcendentals=0,
        bytes_accessed=M_pad * IN_DIM * 4 + M_pad * OUT_DIM * out_bytes
        + 4 * (w1p.size + w2p.size + b1p.size + b2p.size),
    )

    outp = pl.pallas_call(
        _mlp_kernel,
        out_shape=jax.ShapeDtypeStruct((M_pad // PACK, LANES), out_dtype),
        grid_spec=pl.GridSpec(
            grid=grid,
            in_specs=[
                pl.BlockSpec((rows_b, IN_LANES), lambda i: (i, 0)),
                pl.BlockSpec((IN_LANES, LANES), lambda i: (0, 0)),
                pl.BlockSpec((1, LANES), lambda i: (0, 0)),
                pl.BlockSpec((LANES, LANES), lambda i: (0, 0)),
                pl.BlockSpec((1, LANES), lambda i: (0, 0)),
            ],
            out_specs=pl.BlockSpec((rows_b, LANES), lambda i: (i, 0)),
        ),
        compiler_params=pltpu.CompilerParams(
            dimension_semantics=("parallel",),
            vmem_limit_bytes=vmem_limit,
        ),
        cost_estimate=cost,
    )(xp, w1p, b1p, w2p, b2p)

    # Row-major reinterpretation back to (M_pad, 32), drop padded rows, reshape.
    out = outp.reshape(M_pad, OUT_DIM)
    if M_pad != M:
        out = out[:M]
    return out.reshape(N, k, OUT_DIM)


def init_params(key):
    """Deterministic init mimicking PyTorch's default Linear init
    (uniform(-1/sqrt(fan_in), 1/sqrt(fan_in)))."""
    k1, k2, k3, k4 = jax.random.split(key, 4)
    bound1 = 1.0 / jnp.sqrt(IN_DIM)
    bound2 = 1.0 / jnp.sqrt(HIDDEN)
    w1 = jax.random.uniform(k1, (IN_DIM, HIDDEN), jnp.float32, -bound1, bound1)
    b1 = jax.random.uniform(k2, (HIDDEN,), jnp.float32, -bound1, bound1)
    w2 = jax.random.uniform(k3, (HIDDEN, OUT_DIM), jnp.float32, -bound2, bound2)
    b2 = jax.random.uniform(k4, (OUT_DIM,), jnp.float32, -bound2, bound2)
    return w1, b1, w2, b2


def _reference(x, w1, b1, w2, b2):
    hi = jax.lax.Precision.HIGHEST
    h = jnp.maximum(jnp.dot(x, w1, precision=hi) + b1, 0.0)
    return jnp.maximum(jnp.dot(h, w2, precision=hi) + b2, 0.0)


if __name__ == "__main__":
    key = jax.random.PRNGKey(0)
    kx, kx2, kp = jax.random.split(key, 3)
    w1, b1, w2, b2 = init_params(kp)

    # Round the test data to bf16-representable values so the comparison is
    # insensitive to whichever f32 multi-pass decomposition the MXU uses.
    exact = lambda a: a.astype(jnp.bfloat16).astype(jnp.float32)
    w1, b1, w2, b2 = map(exact, (w1, b1, w2, b2))

    # Small shape consistent with the module: (N, k, 3) candidate (x, y, o).
    N, k = 2, 8
    x = exact(jax.random.normal(kx, (N, k, IN_DIM), jnp.float32))
    out = jax.block_until_ready(position_encoder_simple(x, w1, b1, w2, b2))
    ref = _reference(x, w1, b1, w2, b2)
    assert out.shape == (N, k, OUT_DIM), out.shape
    assert jnp.allclose(out, ref, atol=5e-3, rtol=5e-3), "mismatch vs reference"

    # Ragged row count exercises the pad / slice / repack path.
    N2, k2 = 5, 7
    x_r = exact(jax.random.normal(kx2, (N2, k2, IN_DIM), jnp.float32))
    out_r = jax.block_until_ready(position_encoder_simple(x_r, w1, b1, w2, b2))
    ref_r = _reference(x_r, w1, b1, w2, b2)
    assert out_r.shape == (N2, k2, OUT_DIM), out_r.shape
    assert jnp.allclose(out_r, ref_r, atol=5e-3, rtol=5e-3), "mismatch vs reference"

    print("KERNEL_OK")
</pallas_src>

<mosaic_0001>
module attributes {stable_mosaic.version = 11 : i64} {
  func.func @_mlp_kernel(%arg0: i32, %arg1: memref<8x12xf32, #tpu.memory_space<vmem>>, %arg2: memref<12x128xf32, #tpu.memory_space<vmem>>, %arg3: memref<1x128xf32, #tpu.memory_space<vmem>>, %arg4: memref<128x128xf32, #tpu.memory_space<vmem>>, %arg5: memref<1x128xf32, #tpu.memory_space<vmem>>, %arg6: memref<8x128xf32, #tpu.memory_space<vmem>>) attributes {dimension_semantics = [#tpu.dimension_semantics<parallel>], iteration_bounds = array<i64: 1>, scalar_prefetch = 0 : i64, scratch_operands = 0 : i64, tpu.core_type = #tpu.core_type<tc>, window_params = [{transform_indices = @transform_0, window_bounds = array<i64: 8, 12>}, {pipeline_mode = #tpu.pipeline_mode<synchronous>, transform_indices = @transform_1, window_bounds = array<i64: 12, 128>}, {pipeline_mode = #tpu.pipeline_mode<synchronous>, transform_indices = @transform_2, window_bounds = array<i64: 1, 128>}, {pipeline_mode = #tpu.pipeline_mode<synchronous>, transform_indices = @transform_3, window_bounds = array<i64: 128, 128>}, {pipeline_mode = #tpu.pipeline_mode<synchronous>, transform_indices = @transform_4, window_bounds = array<i64: 1, 128>}, {transform_indices = @transform_5, window_bounds = array<i64: 8, 128>}]} {
    %c0 = arith.constant 0 : index
    %c0_0 = arith.constant 0 : index
    %0 = vector.load %arg1[%c0, %c0_0] : memref<8x12xf32, #tpu.memory_space<vmem>>, vector<8x12xf32>
    %c0_1 = arith.constant 0 : index
    %c0_2 = arith.constant 0 : index
    %1 = vector.load %arg2[%c0_1, %c0_2] : memref<12x128xf32, #tpu.memory_space<vmem>>, vector<12x128xf32>
    %cst = arith.constant dense<0.000000e+00> : vector<8x128xf32>
    %2 = tpu.matmul %0, %1, %cst {dimension_numbers = #tpu.dot_dimension_numbers<[1], [0], [0], [1], [0, 0, 1, 1], [], []>} : vector<8x12xf32>, vector<12x128xf32>, vector<8x128xf32> -> vector<8x128xf32>
    %c0_3 = arith.constant 0 : index
    %c0_4 = arith.constant 0 : index
    %3 = vector.load %arg3[%c0_3, %c0_4] : memref<1x128xf32, #tpu.memory_space<vmem>>, vector<1x128xf32>
    %4 = vector.broadcast %3 : vector<1x128xf32> to vector<8x128xf32>
    %5 = arith.addf %2, %4 : vector<8x128xf32>
    %cst_5 = arith.constant 0.000000e+00 : f32
    %6 = vector.broadcast %cst_5 : f32 to vector<8x128xf32>
    %7 = arith.maximumf %5, %6 : vector<8x128xf32>
    %c0_6 = arith.constant 0 : index
    %c0_7 = arith.constant 0 : index
    %8 = vector.load %arg4[%c0_6, %c0_7] : memref<128x128xf32, #tpu.memory_space<vmem>>, vector<128x128xf32>
    %cst_8 = arith.constant dense<0.000000e+00> : vector<8x128xf32>
    %9 = tpu.matmul %7, %8, %cst_8 {dimension_numbers = #tpu.dot_dimension_numbers<[1], [0], [0], [1], [0, 0, 1, 1], [], []>} : vector<8x128xf32>, vector<128x128xf32>, vector<8x128xf32> -> vector<8x128xf32>
    %c0_9 = arith.constant 0 : index
    %c0_10 = arith.constant 0 : index
    %10 = vector.load %arg5[%c0_9, %c0_10] : memref<1x128xf32, #tpu.memory_space<vmem>>, vector<1x128xf32>
    %11 = vector.broadcast %10 : vector<1x128xf32> to vector<8x128xf32>
    %12 = arith.addf %9, %11 : vector<8x128xf32>
    %cst_11 = arith.constant 0.000000e+00 : f32
    %13 = vector.broadcast %cst_11 : f32 to vector<8x128xf32>
    %14 = arith.maximumf %12, %13 : vector<8x128xf32>
    %c0_12 = arith.constant 0 : index
    %c0_13 = arith.constant 0 : index
    %15 = vector.load %arg6[%c0_12, %c0_13] : memref<8x128xf32, #tpu.memory_space<vmem>>, vector<8x128xf32>
    tpu.vector_store %arg6[%c0_12, %c0_13], %14 {strides = array<i32>} : memref<8x128xf32, #tpu.memory_space<vmem>>, vector<8x128xf32>,
    return
  }
  func.func @transform_0(%arg0: i32) -> (i32, i32) {
    %c0_i32 = arith.constant 0 : i32
    %c0_i32_0 = arith.constant 0 : i32
    return %arg0, %c0_i32 : i32, i32
  }
  func.func @transform_1(%arg0: i32) -> (i32, i32) {
    %c0_i32 = arith.constant 0 : i32
    %c0_i32_0 = arith.constant 0 : i32
    %c0_i32_1 = arith.constant 0 : i32
    return %c0_i32, %c0_i32_0 : i32, i32
  }
  func.func @transform_2(%arg0: i32) -> (i32, i32) {
    %c0_i32 = arith.constant 0 : i32
    %c0_i32_0 = arith.constant 0 : i32
    %c0_i32_1 = arith.constant 0 : i32
    return %c0_i32, %c0_i32_0 : i32, i32
  }
  func.func @transform_3(%arg0: i32) -> (i32, i32) {
    %c0_i32 = arith.constant 0 : i32
    %c0_i32_0 = arith.constant 0 : i32
    %c0_i32_1 = arith.constant 0 : i32
    return %c0_i32, %c0_i32_0 : i32, i32
  }
  func.func @transform_4(%arg0: i32) -> (i32, i32) {
    %c0_i32 = arith.constant 0 : i32
    %c0_i32_0 = arith.constant 0 : i32
    %c0_i32_1 = arith.constant 0 : i32
    return %c0_i32, %c0_i32_0 : i32, i32
  }
  func.func @transform_5(%arg0: i32) -> (i32, i32) {
    %c0_i32 = arith.constant 0 : i32
    %c0_i32_0 = arith.constant 0 : i32
    return %arg0, %c0_i32 : i32, i32
  }
}

</mosaic_0001>

<llo_original>
// kernel: tile.13
$region0: #{tile.13}
  #allocation0 [shape = 's32[1]{0}', space=sflag, size = 0x4, scoped, tag = 'scoped memory for tile.13']
  %s0 = inlined_call_operand.vmem [shape: f32[32], index: 0, kind: input, shape index: {}]
  %s1 = inlined_call_operand.vmem [shape: f32[4,32], index: 1, kind: output, shape index: {}]
  // Predicated region
  $region2: #{tile.13} parent=0 // pred_check
    _
  $region3: #{tile.13} parent=0 // pred_check_branch
    %3 = sbr.rel (0) target = $region5
  $region4: #{tile.13} parent=0 // pred_region
    _
  $region5: #{tile.13} parent=0 // pred_fallthru
    _
  %v4 = vld [vmem:[%s0] ss:$0 sm:$0xff]
  %5 = vst [vmem:[%s1] sm:$0xf] %v4

// kernel: tile.14
$region0: #{tile.14}
  %s0 = inlined_call_operand.vmem [shape: f32[4,32], index: 0, kind: input, shape index: {}]
  %s1 = inlined_call_operand.vmem [shape: f32[1,128], index: 1, kind: output, shape index: {}]
  $region1: #{tile.14} parent=0
    #allocation0 [shape = 'u8[4096]{0}', space=vmem, size = 0x1000, scoped, tag = 'scoped mem for output reshape']
    #allocation1 [shape = 'u8[4096]{0}', space=vmem, size = 0x1000, scoped, tag = 'scoped mem for input reshape']
    %s3 = ssub.s32 16, 1
    %v4 = vld [vmem:[%s0] sm:%s3]
    %5 = vst [vmem:[#allocation1] sm:%s3] %v4
    %v6 = vld [vmem:[#allocation1] sm:$0x1]
    %vm7 = vcmask 261120
    %8 = vst.msk [vmem:[#allocation0] sm:$0x1] %vm7, %v6
    %s9 = scalar_lea.vmem [#allocation1], 3
    %v10 = vld [vmem:[%s9] sm:$0x1]
    %11 = vrot.lane.b32.xlu0 %v10, 96
    %v12 = vpop.permute.xlu0 %11
    %vm13 = vcmask 1048320
    %14 = vst.msk [vmem:[#allocation0] sm:$0x1] %vm13, %v12
    %s15 = scalar_lea.vmem [#allocation1], 2
    %v16 = vld [vmem:[%s15] sm:$0x1]
    %17 = vrot.lane.b32.xlu0 %v16, 64
    %v18 = vpop.permute.xlu0 %17
    %vm19 = vcmask 785920
    %20 = vst.msk [vmem:[#allocation0] sm:$0x1] %vm19, %v18
    %s21 = scalar_lea.vmem [#allocation1], 1
    %v22 = vld [vmem:[%s21] sm:$0x1]
    %23 = vrot.lane.b32.xlu0 %v22, 32
    %v24 = vpop.permute.xlu0 %23
    %vm25 = vcmask 523520
    %26 = vst.msk [vmem:[#allocation0] sm:$0x1] %vm25, %v24
    %s28 = ssub.s32 2, 1
    %v29 = vld [vmem:[#allocation0] sm:%s28]
    %s31 = ssub.s32 2, 1
    %32 = vst [vmem:[%s1] sm:%s31] %v29

// kernel: position_encoder_simple.1
$region0: #{position_encoder_simple.1}
  #allocation0 [shape = 'u32[]', space=smem, size = 0x4, offset = 0x4, fixed_abs, tag = 'smem constant byte address 0x4 - core index']
  #allocation1 [shape = 'u32[72,128]{1,0:T(1,128)}', space=vmem, size = 0x9000, scoped, tag = 'internal scratch']
  %s0 = inlined_call_operand.vmem [shape: f32[8,12], index: 0, kind: input, shape index: {}]
  %s1 = inlined_call_operand.vmem [shape: f32[12,128], index: 1, kind: input, shape index: {}]
  %s2 = inlined_call_operand.vmem [shape: f32[1,128], index: 2, kind: input, shape index: {}]
  %s3 = inlined_call_operand.vmem [shape: f32[128,128], index: 3, kind: input, shape index: {}]
  %s4 = inlined_call_operand.vmem [shape: f32[1,128], index: 4, kind: input, shape index: {}]
  %s5 = inlined_call_operand.vmem [shape: f32[8,128], index: 5, kind: output, shape index: {}]
  %s6 = sld [smem:[#allocation0]]
  $region30: #{position_encoder_simple.1} parent=0
    _
  %s8 = ssub.s32 1, %s6
  %s9 = scalar_select 0, %s8, %s6
  // Predicated region
  $region2: #{position_encoder_simple.1} parent=0 // pred_check
    _
  $region3: #{position_encoder_simple.1} parent=0 // pred_check_branch
    %11 = sbr.rel (0) target = $region5
  $region4: #{position_encoder_simple.1} parent=0 // pred_region
    _
  $region5: #{position_encoder_simple.1} parent=0 // pred_fallthru
    _
  // Predicated region
  $region6: #{position_encoder_simple.1} parent=0 // pred_check
    _
  $region7: #{position_encoder_simple.1} parent=0 // pred_check_branch
    %13 = sbr.rel (0) target = $region9
  $region8: #{position_encoder_simple.1} parent=0 // pred_region
    _
  $region9: #{position_encoder_simple.1} parent=0 // pred_fallthru
    _
  // Predicated region
  $region10: #{position_encoder_simple.1} parent=0 // pred_check
    _
  $region11: #{position_encoder_simple.1} parent=0 // pred_check_branch
    %15 = sbr.rel (0) target = $region13
  $region12: #{position_encoder_simple.1} parent=0 // pred_region
    _
  $region13: #{position_encoder_simple.1} parent=0 // pred_fallthru
    _
  // Predicated region
  $region14: #{position_encoder_simple.1} parent=0 // pred_check
    _
  $region15: #{position_encoder_simple.1} parent=0 // pred_check_branch
    %17 = sbr.rel (0) target = $region17
  $region16: #{position_encoder_simple.1} parent=0 // pred_region
    _
  $region17: #{position_encoder_simple.1} parent=0 // pred_fallthru
    _
  // Predicated region
  $region18: #{position_encoder_simple.1} parent=0 // pred_check
    _
  $region19: #{position_encoder_simple.1} parent=0 // pred_check_branch
    %19 = sbr.rel (0) target = $region21
  $region20: #{position_encoder_simple.1} parent=0 // pred_region
    _
  $region21: #{position_encoder_simple.1} parent=0 // pred_fallthru
    _
  %v20 = vld [vmem:[%s0] sm:$0xff]
  %v21 = vld [vmem:[%s1] sm:$0xff]
  %v22 = vld [vmem:[%s1 + $0x8] sm:$0xf]
  %v23 = vld [vmem:[%s2] sm:$0x1]
  %v25 = vperm.slane %v23, 0
  %vm27 = vcmask 97280
  %v29 = vsel %vm27, %v20, 0
  %vm31 = vcmask 1043456
  %v33 = vsel %vm31, %v22, 0
  %35 = vmatpush.msra.mxu0 0.0
  %36 = vmatpush.msra.mxu0 0.0
  %37 = vmatpush.msra.mxu0 0.0
  %38 = vmatpush.msra.mxu0 0.0
  %39 = vmatpush.msra.mxu0 0.0
  %40 = vmatpush.msra.mxu0 0.0
  %41 = vmatpush.msra.mxu0 0.0
  %42 = vmatpush.msra.mxu0 0.0
  %43 = vmatpush.msra.mxu0 0.0
  %44 = vmatpush.msra.mxu0 0.0
  %45 = vmatpush.msra.mxu0 0.0
  %46 = vmatpush.msra.mxu0 0.0
  %47 = vmatpush.msra.mxu0 0.0
  %48 = vmatpush.msra.mxu0 0.0
  %49 = vmatpush.msra.mxu0 %v33
  %50 = vmatpush.msra.mxu0 %v21
  %51 = vmatmul.f32.gmra.mxu0 %v29
  %v52 = vpop.f32.mrf.mxu0
  %v53 = vadd.f32 %v25, %v52
  %54 = vdwg.mxu0
  %v55 = vmax.f32 %v53, 0.0
  %v56 = vld [vmem:[%s3] sm:$0xff]
  %v57 = vld [vmem:[%s3 + $0x8] sm:$0xff]
  %v58 = vld [vmem:[%s3 + $0x10] sm:$0xff]
  %v59 = vld [vmem:[%s3 + $0x18] sm:$0xff]
  %v60 = vld [vmem:[%s3 + $0x20] sm:$0xff]
  %v61 = vld [vmem:[%s3 + $0x28] sm:$0xff]
  %v62 = vld [vmem:[%s3 + $0x30] sm:$0xff]
  %v63 = vld [vmem:[%s3 + $0x38] sm:$0xff]
  %v64 = vld [vmem:[%s3 + $0x40] sm:$0xff]
  %v65 = vld [vmem:[%s3 + $0x48] sm:$0xff]
  %v66 = vld [vmem:[%s3 + $0x50] sm:$0xff]
  %v67 = vld [vmem:[%s3 + $0x58] sm:$0xff]
  %v68 = vld [vmem:[%s3 + $0x60] sm:$0xff]
  %v69 = vld [vmem:[%s3 + $0x68] sm:$0xff]
  %v70 = vld [vmem:[%s3 + $0x70] sm:$0xff]
  %v71 = vld [vmem:[%s3 + $0x78] sm:$0xff]
  %v72 = vld [vmem:[%s4] sm:$0x1]
  %v74 = vperm.slane %v72, 0
  %76 = vmatpush.msra.mxu0 %v71
  %77 = vmatpush.msra.mxu0 %v70
  %78 = vmatpush.msra.mxu0 %v69
  %79 = vmatpush.msra.mxu0 %v68
  %80 = vmatpush.msra.mxu0 %v67
  %81 = vmatpush.msra.mxu0 %v66
  %82 = vmatpush.msra.mxu0 %v65
  %83 = vmatpush.msra.mxu0 %v64
  %84 = vmatpush.msra.mxu0 %v63
  %85 = vmatpush.msra.mxu0 %v62
  %86 = vmatpush.msra.mxu0 %v61
  %87 = vmatpush.msra.mxu0 %v60
  %88 = vmatpush.msra.mxu0 %v59
  %89 = vmatpush.msra.mxu0 %v58
  %90 = vmatpush.msra.mxu0 %v57
  %91 = vmatpush.msra.mxu0 %v56
  %92 = vmatmul.f32.gmra.mxu0 %v55
  %v93 = vpop.f32.mrf.mxu0
  %v94 = vadd.f32 %v74, %v93
  %95 = vdwg.mxu0
  %v96 = vmax.f32 %v94, 0.0
  %97 = vst [vmem:[%s5] sm:$0xff] %v96
  // Predicated region
  $region22: #{position_encoder_simple.1} parent=0 // pred_check
    _
  $region23: #{position_encoder_simple.1} parent=0 // pred_check_branch
    %99 = sbr.rel (0) target = $region25
  $region24: #{position_encoder_simple.1} parent=0 // pred_region
    _
  $region25: #{position_encoder_simple.1} parent=0 // pred_fallthru
    _
  // Predicated region
  $region26: #{position_encoder_simple.1} parent=0 // pred_check
    _
  $region27: #{position_encoder_simple.1} parent=0 // pred_check_branch
    %101 = sbr.rel (0) target = $region29
  $region28: #{position_encoder_simple.1} parent=0 // pred_region
    _
  $region29: #{position_encoder_simple.1} parent=0 // pred_fallthru
    _

</llo_original>
